<compile_context>
chip_gen: v6e
topology: v6e:2x2x1
jax: 0.10.0
libtpu: 0.0.40
codegen_flags: <defaults>
</compile_context>

<pallas_src>
import jax
import jax.numpy as jnp
from jax.experimental import pallas as pl
from jax.experimental.pallas import tpu as pltpu


# -----------------------------------------------------------------------------
# Pallas kernel
# -----------------------------------------------------------------------------
def _crelu_kernel(x_ref, o_ref):
    """x_ref: (tb, tr, 128).  o_ref: (tb, 2, tr, 128).

    o[:, 0] = relu(x),  o[:, 1] = relu(-x).
    Both stores are full 128-lane, sublane-aligned vector stores.
    """
    x = x_ref[...]
    zero = jnp.zeros((), dtype=x.dtype)
    o_ref[:, 0, :, :] = jnp.maximum(x, zero)
    o_ref[:, 1, :, :] = jnp.maximum(-x, zero)


# -----------------------------------------------------------------------------
# Tiling heuristics
# -----------------------------------------------------------------------------
def _round_up(x, m):
    return ((x + m - 1) // m) * m


def _choose_tiles(B, r, itemsize):
    """Pick (tb, tr): batch-rows and feature-rows (of 128 lanes) per block."""
    # dtype-aware sublane multiple (sub-32-bit dtypes pack along sublanes)
    sub = {4: 8, 2: 16, 1: 32}.get(itemsize, 8)

    # ~2 MiB input block => out block 4 MiB; x2 double-buffering ~= 12 MiB
    # of scoped VMEM (fits v5e 16 MiB / v6e 32 MiB / v7x 32 MiB defaults).
    target_elems = (2 * 1024 * 1024) // itemsize
    max_tr = max(sub, (target_elems // 128 // sub) * sub)

    if r <= sub:
        tr = r                       # full-extent feature dim (always legal)
    else:
        tr = min(_round_up(r, sub), max_tr)

    tb = max(1, min(B, target_elems // (tr * 128)))

    # Make sure the grid has >= 2 programs when possible (v7x megacore:
    # 2 TensorCores share 'parallel' grid axes; grid=(1,1) idles one core).
    if pl.cdiv(B, tb) * pl.cdiv(r, tr) == 1:
        if B >= 2:
            tb = pl.cdiv(B, 2)
        elif r > sub:
            tr = max(sub, _round_up(pl.cdiv(r, 2), sub))
    return tb, tr


# -----------------------------------------------------------------------------
# Wrapper
# -----------------------------------------------------------------------------
def crelu(x):
    """CReLU for NCHW input: concat([relu(x), relu(-x)], axis=1)."""
    B, C, H, W = x.shape
    n = C * H * W
    n_pad = _round_up(n, 128)        # lane-dense: last dim multiple of 128
    r = n_pad // 128
    itemsize = jnp.dtype(x.dtype).itemsize

    x2 = x.reshape(B, n)
    if n_pad != n:
        x2 = jnp.pad(x2, ((0, 0), (0, n_pad - n)))
    x3 = x2.reshape(B, r, 128)

    tb, tr = _choose_tiles(B, r, itemsize)
    grid = (pl.cdiv(B, tb), pl.cdiv(r, tr))

    out = pl.pallas_call(
        _crelu_kernel,
        out_shape=jax.ShapeDtypeStruct((B, 2, r, 128), x.dtype),
        grid=grid,
        in_specs=[pl.BlockSpec((tb, tr, 128), lambda i, j: (i, j, 0))],
        out_specs=pl.BlockSpec((tb, 2, tr, 128), lambda i, j: (i, 0, j, 0)),
        compiler_params=pltpu.CompilerParams(
            dimension_semantics=("parallel", "parallel")),
    )(x3)

    out = out.reshape(B, 2, n_pad)
    if n_pad != n:
        out = out[:, :, :n]
    return out.reshape(B, 2 * C, H, W)


# -----------------------------------------------------------------------------
# Demo / self-check
# -----------------------------------------------------------------------------
if __name__ == "__main__":
    key = jax.random.PRNGKey(0)
    fwd = jax.jit(crelu)

    # Primary shape (matches the module's typical NCHW activation).
    x = jax.random.normal(key, (2, 4, 16, 16), dtype=jnp.float32)
    out = fwd(x)
    jax.block_until_ready(out)
    ref = jnp.concatenate([jnp.maximum(x, 0.0), jnp.maximum(-x, 0.0)], axis=1)
    assert out.shape == (2, 8, 16, 16)
    assert bool(jnp.all(out == ref))

    # Ragged shape: n not a multiple of 128, batch not a multiple of the tile
    # (exercises the padding + masked-tail paths).
    x_odd = jax.random.normal(key, (3, 3, 5, 7), dtype=jnp.float32)
    out_odd = jax.jit(crelu)(x_odd)
    jax.block_until_ready(out_odd)
    ref_odd = jnp.concatenate(
        [jnp.maximum(x_odd, 0.0), jnp.maximum(-x_odd, 0.0)], axis=1)
    assert out_odd.shape == (3, 6, 5, 7)
    assert bool(jnp.all(out_odd == ref_odd))

    print("KERNEL_OK")
</pallas_src>

<mosaic_0001>
module attributes {stable_mosaic.version = 11 : i64} {
  func.func @_crelu_kernel(%arg0: i32, %arg1: i32, %arg2: memref<1x8x128xf32, #tpu.memory_space<vmem>>, %arg3: memref<1x2x8x128xf32, #tpu.memory_space<vmem>>) attributes {dimension_semantics = [#tpu.dimension_semantics<parallel>, #tpu.dimension_semantics<parallel>], iteration_bounds = array<i64: 2, 1>, scalar_prefetch = 0 : i64, scratch_operands = 0 : i64, tpu.core_type = #tpu.core_type<tc>, window_params = [{transform_indices = @transform_0, window_bounds = array<i64: 1, 8, 128>}, {transform_indices = @transform_1, window_bounds = array<i64: 1, 2, 8, 128>}]} {
    %c0 = arith.constant 0 : index
    %c0_0 = arith.constant 0 : index
    %c0_1 = arith.constant 0 : index
    %0 = vector.load %arg2[%c0, %c0_0, %c0_1] : memref<1x8x128xf32, #tpu.memory_space<vmem>>, vector<1x8x128xf32>
    %cst = arith.constant 0.000000e+00 : f32
    %1 = vector.broadcast %cst : f32 to vector<1x8x128xf32>
    %2 = arith.maximumf %0, %1 : vector<1x8x128xf32>
    %c0_2 = arith.constant 0 : index
    %c0_3 = arith.constant 0 : index
    %c0_4 = arith.constant 0 : index
    %c0_5 = arith.constant 0 : index
    %3 = vector.load %arg3[%c0_2, %c0_3, %c0_4, %c0_5] : memref<1x2x8x128xf32, #tpu.memory_space<vmem>>, vector<1x1x8x128xf32>
    %4 = vector.shape_cast %3 : vector<1x1x8x128xf32> to vector<1x8x128xf32>
    %5 = vector.shape_cast %2 : vector<1x8x128xf32> to vector<1x1x8x128xf32>
    tpu.vector_store %arg3[%c0_2, %c0_3, %c0_4, %c0_5], %5 {strides = array<i32>} : memref<1x2x8x128xf32, #tpu.memory_space<vmem>>, vector<1x1x8x128xf32>,
    %cst_6 = arith.constant 0.000000e+00 : f32
    %6 = vector.broadcast %cst_6 : f32 to vector<1x8x128xf32>
    %7 = arith.subf %6, %0 : vector<1x8x128xf32>
    %cst_7 = arith.constant 0.000000e+00 : f32
    %8 = vector.broadcast %cst_7 : f32 to vector<1x8x128xf32>
    %9 = arith.maximumf %7, %8 : vector<1x8x128xf32>
    %c0_8 = arith.constant 0 : index
    %c1 = arith.constant 1 : index
    %c0_9 = arith.constant 0 : index
    %c0_10 = arith.constant 0 : index
    %10 = vector.load %arg3[%c0_8, %c1, %c0_9, %c0_10] : memref<1x2x8x128xf32, #tpu.memory_space<vmem>>, vector<1x1x8x128xf32>
    %11 = vector.shape_cast %10 : vector<1x1x8x128xf32> to vector<1x8x128xf32>
    %12 = vector.shape_cast %9 : vector<1x8x128xf32> to vector<1x1x8x128xf32>
    tpu.vector_store %arg3[%c0_8, %c1, %c0_9, %c0_10], %12 {strides = array<i32>} : memref<1x2x8x128xf32, #tpu.memory_space<vmem>>, vector<1x1x8x128xf32>,
    return
  }
  func.func @transform_0(%arg0: i32, %arg1: i32) -> (i32, i32, i32) {
    %c0_i32 = arith.constant 0 : i32
    %c0_i32_0 = arith.constant 0 : i32
    return %arg0, %arg1, %c0_i32 : i32, i32, i32
  }
  func.func @transform_1(%arg0: i32, %arg1: i32) -> (i32, i32, i32, i32) {
    %c0_i32 = arith.constant 0 : i32
    %c0_i32_0 = arith.constant 0 : i32
    %c0_i32_1 = arith.constant 0 : i32
    return %arg0, %c0_i32, %arg1, %c0_i32_0 : i32, i32, i32, i32
  }
}

</mosaic_0001>

<llo_original>
// kernel: crelu.1
$region0: #{crelu.1}
  #allocation0 [shape = 'u32[]', space=smem, size = 0x4, offset = 0x4, fixed_abs, tag = 'smem constant byte address 0x4 - core index']
  #allocation1 [shape = 'u32[144,128]{1,0:T(1,128)}', space=vmem, size = 0x12000, scoped, tag = 'internal scratch']
  %s0 = inlined_call_operand.vmem [shape: f32[2,8,128], index: 0, kind: input, shape index: {}]
  %s1 = inlined_call_operand.vmem [shape: f32[2,2,8,128], index: 1, kind: output, shape index: {}]
  %s2 = sld [smem:[#allocation0]]
  $region37: #{crelu.1} parent=0
    _
  %s4 = ssub.s32 1, %s2
  %s5 = scalar_select 0, %s4, %s2
  loop: start=0, step=1, limit=4
  $region2: #{crelu.1} parent=0 // loop_pre_header
    _
  $region3: #{crelu.1} parent=0 // loop_header
    %s7 = sphi 0, %s11
    %p8 = scmp.ge.s32.totalorder %s7, 4
    %s14 = sphi 0, %s26
    %s15 = sphi 0, %s22
    %s16 = sphi 0, %s14
    %s17 = sphi 0, %s15
    %s18 = sphi 0, %s16
    %s19 = sphi 0, %s17
    %s31 = sphi 0, %s33
    %s34 = sphi 0, %s31
    %s35 = sphi 0, %s34
    %s51 = sphi 0, %s35
    %s59 = sphi 0, %s61
    %s62 = sphi 0, %s59
    %s63 = sphi 0, %s62
    %s79 = sphi 0, %s63
  $region4: #{crelu.1} parent=0 // loop_header_branch
    %10 = sbr.rel (%p8) target = $region8
  $region5: #{crelu.1} parent=0 // loop_body
    %s12 = ssub.s32 %s7, 1
    %s13 = ssub.s32 %s7, 2
    %s20 = sadd.s32 1, %s15
    %p21 = scmp.ge.s32.totalorder %s20, 1
    %s22 = scalar_select %p21, 0, %s20
    %s23 = sadd.s32 1, %s14
    %s24 = scalar_select %p21, %s23, %s14
    %p25 = scmp.ge.s32.totalorder %s24, 2
    %s26 = scalar_select %p25, 0, %s24
    %s27 = ssub.s32 %s14, %s26
    %s28 = ssub.s32 %s15, %s22
    %s29 = sor.u32 %s27, %s28
    %p30 = scmp.eq.s32.totalorder %s29, 0
    %s32 = sadd.s32 %s31, 1
    %s33 = scalar_select %p30, %s31, %s32
    %p36 = pneg %p30
    %p37 = scmp.eq.s32.totalorder %s7, 1
    %p38 = por %p36, %p37
    %p39 = scmp.ne.s32.totalorder %s31, %s34
    %p40 = scmp.eq.s32.totalorder %s7, 0
    %p41 = por %p39, %p40
    %p42 = scmp.ne.s32.totalorder %s31, %s34
    %p43 = scmp.eq.s32.totalorder %s12, 1
    %p44 = por %p42, %p43
    %p45 = scmp.ne.s32.totalorder %s34, %s35
    %p46 = scmp.eq.s32.totalorder %s12, 0
    %p47 = por %p45, %p46
    %p48 = scmp.ne.s32.totalorder %s34, %s35
    %p49 = scmp.eq.s32.totalorder %s13, 1
    %p50 = por %p48, %p49
    %p52 = scmp.ne.s32.totalorder %s35, %s51
    %p53 = scmp.eq.s32.totalorder %s13, 0
    %p54 = por %p52, %p53
    %s55 = ssub.s32 %s14, %s26
    %s56 = ssub.s32 %s15, %s22
    %s57 = sor.u32 %s55, %s56
    %p58 = scmp.eq.s32.totalorder %s57, 0
    %s60 = sadd.s32 %s59, 1
    %s61 = scalar_select %p58, %s59, %s60
    %p64 = pneg %p58
    %p65 = scmp.eq.s32.totalorder %s7, 1
    %p66 = por %p64, %p65
    %p67 = scmp.ne.s32.totalorder %s59, %s62
    %p68 = scmp.eq.s32.totalorder %s7, 0
    %p69 = por %p67, %p68
    %p70 = scmp.ne.s32.totalorder %s59, %s62
    %p71 = scmp.eq.s32.totalorder %s12, 1
    %p72 = por %p70, %p71
    %p73 = scmp.ne.s32.totalorder %s62, %s63
    %p74 = scmp.eq.s32.totalorder %s12, 0
    %p75 = por %p73, %p74
    %p76 = scmp.ne.s32.totalorder %s62, %s63
    %p77 = scmp.eq.s32.totalorder %s13, 1
    %p78 = por %p76, %p77
    %p80 = scmp.ne.s32.totalorder %s63, %s79
    %p81 = scmp.eq.s32.totalorder %s13, 0
    %p82 = por %p80, %p81
    %p83 = scmp.le.s32.totalorder 1, %s7
    %p84 = scmp.lt.s32.totalorder %s7, 3
    %p85 = pnand %p83, %p84
    %p86 = pneg %p85
    // Predicated region
    $region9: #{crelu.1} parent=5 // pred_check
      _
    $region10: #{crelu.1} parent=5 // pred_check_branch
      %88 = sbr.rel (%p85) target = $region12
    $region11: #{crelu.1} parent=5 // pred_region
      %s89 = ssub.s32 %s7, 1
    $region12: #{crelu.1} parent=5 // pred_fallthru
      _
    %p90 = scmp.lt.s32.totalorder %s7, 2
    // Predicated region
    $region13: #{crelu.1} parent=5 // pred_check
      %p91 = pneg %p90
    $region14: #{crelu.1} parent=5 // pred_check_branch
      %93 = sbr.rel (%p91) target = $region16
    $region15: #{crelu.1} parent=5 // pred_region
      // Predicated region
      $region17: #{crelu.1} parent=15 // pred_check
        %p94 = pneg %p41
      $region18: #{crelu.1} parent=15 // pred_check_branch
        %96 = sbr.rel (%p94) target = $region20
      $region19: #{crelu.1} parent=15 // pred_region
        %p97 = scmp.lt.s32.totalorder %s14, 1
        %s98 = scalar_select %p97, %s14, 1
        %p99 = scmp.lt.s32.totalorder %s15, 0
        %s100 = scalar_select %p99, %s15, 0
        %s101 = sadd.s32 %s100, %s98
        %s102 = smul.addr %s101, 8
        %s103 = scalar_lea.vmem %s0, %s102
      $region20: #{crelu.1} parent=15 // pred_fallthru
        _
    $region16: #{crelu.1} parent=5 // pred_fallthru
      _
    %p104 = scmp.le.s32.totalorder 1, %s7
    %p105 = scmp.lt.s32.totalorder %s7, 3
    %p106 = pnand %p104, %p105
    %p107 = pneg %p106
    // Predicated region
    $region21: #{crelu.1} parent=5 // pred_check
      _
    $region22: #{crelu.1} parent=5 // pred_check_branch
      %109 = sbr.rel (%p106) target = $region24
    $region23: #{crelu.1} parent=5 // pred_region
      %s110 = ssub.s32 %s7, 1
      %p111 = scmp.lt.s32.totalorder %s16, 1
      %s112 = scalar_select %p111, %s16, 1
      %p113 = scmp.lt.s32.totalorder %s17, 0
      %s114 = scalar_select %p113, %s17, 0
      %s115 = sadd.s32 %s114, %s112
      %s116 = smul.addr %s115, 8
      %s117 = scalar_lea.vmem %s0, %s116
      %p118 = pneg %p47
      %p119 = pneg %p44
      %p120 = pneg %p75
      %p121 = pneg %p72
      %p122 = scmp.lt.s32.totalorder %s16, 1
      %s123 = scalar_select %p122, %s16, 1
      %p124 = scmp.lt.s32.totalorder %s17, 0
      %s125 = scalar_select %p124, %s17, 0
      %s126 = smul.addr %s123, 2
      %s127 = sadd.s32 %s125, %s126
      %s128 = smul.addr %s127, 8
      %s129 = scalar_lea.vmem %s1, %s128
      %p130 = scmp.lt.s32.totalorder %s16, 1
      %s131 = scalar_select %p130, %s16, 1
      %p132 = scmp.lt.s32.totalorder %s17, 0
      %s133 = scalar_select %p132, %s17, 0
      %s134 = sadd.s32 %s133, %s131
      %s135 = smul.addr %s134, 8
      %s136 = scalar_lea.vmem %s0, %s135
      %p137 = scmp.lt.s32.totalorder %s16, 1
      %s138 = scalar_select %p137, %s16, 1
      %p139 = scmp.lt.s32.totalorder %s17, 0
      %s140 = scalar_select %p139, %s17, 0
      %s141 = smul.addr %s138, 2
      %s142 = sadd.s32 %s140, %s141
      %s143 = smul.addr %s142, 8
      %s144 = scalar_lea.vmem %s1, %s143
      %v145 = vld [vmem:[%s136] sm:$0xff]
      %v146 = vmax.f32 %v145, 0.0
      %147 = vst [vmem:[%s144] sm:$0xff] %v146
      %v148 = vsub.f32 0.0, %v145
      %v149 = vmax.f32 %v148, 0.0
      %s150 = scalar_lea.vmem %s144, 8
      %151 = vst [vmem:[%s150] sm:$0xff] %v149
      %p152 = scmp.lt.s32.totalorder %s16, 1
      %s153 = scalar_select %p152, %s16, 1
      %p154 = scmp.lt.s32.totalorder %s17, 0
      %s155 = scalar_select %p154, %s17, 0
      %s156 = smul.addr %s153, 2
      %s157 = sadd.s32 %s155, %s156
      %s158 = smul.addr %s157, 8
      %s159 = scalar_lea.vmem %s1, %s158
      // Predicated region
      $region25: #{crelu.1} parent=23 // pred_check
        %p160 = pneg %p72
      $region26: #{crelu.1} parent=23 // pred_check_branch
        %162 = sbr.rel (%p160) target = $region28
      $region27: #{crelu.1} parent=23 // pred_region
        _
      $region28: #{crelu.1} parent=23 // pred_fallthru
        _
    $region24: #{crelu.1} parent=5 // pred_fallthru
      _
    %p163 = scmp.le.s32.totalorder 2, %s7
    // Predicated region
    $region29: #{crelu.1} parent=5 // pred_check
      %p164 = pneg %p163
    $region30: #{crelu.1} parent=5 // pred_check_branch
      %166 = sbr.rel (%p164) target = $region32
    $region31: #{crelu.1} parent=5 // pred_region
      %s167 = ssub.s32 %s7, 2
      // Predicated region
      $region33: #{crelu.1} parent=31 // pred_check
        %p168 = pneg %p78
      $region34: #{crelu.1} parent=31 // pred_check_branch
        %170 = sbr.rel (%p168) target = $region36
      $region35: #{crelu.1} parent=31 // pred_region
        %p171 = scmp.lt.s32.totalorder %s18, 1
        %s172 = scalar_select %p171, %s18, 1
        %p173 = scmp.lt.s32.totalorder %s19, 0
        %s174 = scalar_select %p173, %s19, 0
        %s175 = smul.addr %s172, 2
        %s176 = sadd.s32 %s174, %s175
        %s177 = smul.addr %s176, 8
        %s178 = scalar_lea.vmem %s1, %s177
      $region36: #{crelu.1} parent=31 // pred_fallthru
        _
    $region32: #{crelu.1} parent=5 // pred_fallthru
      _
  $region6: #{crelu.1} parent=0 // loop_footer
    %s11 = sadd.s32 1, %s7
  $region7: #{crelu.1} parent=0 // loop_footer_branch
    %6 = sbr.rel target = $region3
  $region8: #{crelu.1} parent=0 // loop_exit
    _

</llo_original>
